<compile_context>
chip_gen: v7x
topology: tpu7x:2x2x1
jax: 0.10.0
libtpu: 0.0.40
codegen_flags: <defaults>
</compile_context>

<pallas_src>
import math

import jax
import jax.numpy as jnp
from jax.experimental import pallas as pl
from jax.experimental.pallas import tpu as pltpu


def _round_up(x: int, m: int) -> int:
    return (x + m - 1) // m * m


def patch_embed_kernel(x_ref, w_ref, pos_ref, o_ref):
    # x_ref:   (1, tm, K)  patch tile for one batch element (compute dtype, bf16)
    # w_ref:   (K, E)      projection weight (bf16), VMEM-resident (constant index)
    # pos_ref: (tm, E)     position embeddings + folded conv bias (bf16),
    #                      resident across the inner batch axis
    # o_ref:   (1, tm, E)  output tile (lane-dense: E % 128 == 0)
    y = jnp.dot(x_ref[0], w_ref[...], preferred_element_type=jnp.float32)  # MXU, f32 acc
    y = y + pos_ref[...].astype(jnp.float32)                               # VPU add in f32
    # TODO(synk): nn.Dropout(0.1) is identity in eval mode; training-mode dropout
    # (pltpu.prng_seed + pltpu.prng_random_bits mask) intentionally not applied.
    o_ref[...] = y[None].astype(o_ref.dtype)


def embedding_forward(x, conv_w, conv_b, pos_emb, *, patch_size,
                      tm=256,
                      compute_dtype=jnp.bfloat16,
                      pos_dtype=jnp.bfloat16,
                      out_dtype=None,
                      vmem_cap_bytes=48 * 1024 * 1024,
                      allow_im2col_fusion=True):
    """x: [B, C, H, W] -> [B, n_patches, hidden].  Matches the module's forward (eval mode)."""
    B, C, H, W = x.shape
    P = patch_size
    assert H % P == 0 and W % P == 0, "spatial dims must be divisible by patch_size"
    E = conv_w.shape[0]
    assert conv_w.shape == (E, C, P, P)
    gh, gw = H // P, W // P
    n = gh * gw
    K = C * P * P
    assert pos_emb.shape == (1, n, E)
    # Lane-dense output: last dim multiple of 128 avoids masked partial stores.
    assert E % 128 == 0, "hidden_size should be a multiple of 128 for lane-dense stores"

    out_dtype = x.dtype if out_dtype is None else out_dtype

    # Row tile: sublane-aligned; token axis padded so ragged n is handled.
    tm = max(8, min(tm, _round_up(n, 8)))
    tm = _round_up(tm, 8)
    n_pad = _round_up(n, tm)

    # im2col for a stride==kernel conv: [B, n, C*P*P]; patch features ordered
    # (c, p, q) so they line up with conv_w.reshape(E, C*P*P).  With
    # allow_input_fusion XLA may fuse this producer into the kernel's input
    # pipeline instead of materializing it in HBM.
    patches = (x.reshape(B, C, gh, P, gw, P)
                 .transpose(0, 2, 4, 1, 3, 5)
                 .reshape(B, n, K)
                 .astype(compute_dtype))
    w2d = conv_w.reshape(E, K).T.astype(compute_dtype)                    # [K, E]
    # Fold the conv bias into the position embeddings (one fewer input stream).
    posb = (pos_emb.reshape(n, E) + conv_b.reshape(1, E)).astype(pos_dtype)
    if n_pad != n:
        patches = jnp.pad(patches, ((0, 0), (0, n_pad - n), (0, 0)))
        posb = jnp.pad(posb, ((0, n_pad - n), (0, 0)))

    ci = jnp.dtype(compute_dtype).itemsize
    pi = jnp.dtype(pos_dtype).itemsize
    oi = jnp.dtype(out_dtype).itemsize

    # Single-buffer the resident weight once it is big enough to matter
    # (it is fetched exactly once; double-buffering it only costs VMEM on v7x).
    weight_bytes = K * E * ci
    single_buffer_weight = weight_bytes >= (2 << 20)
    w_spec_kwargs = {}
    if single_buffer_weight:
        w_spec_kwargs["pipeline_mode"] = pl.Buffered(1)
    w_bufs = 1 if single_buffer_weight else 2

    # VMEM limit sized from the actual tiles (double-buffered streams + weight)
    # with headroom, capped below v7x's 64 MiB per-TC budget.  On v5e/v6e you
    # may pass a larger vmem_cap_bytes to enable tm in the 384-512 range.
    per_step_vmem = (w_bufs * weight_bytes
                     + 2 * tm * K * ci          # patch tile (double buffered)
                     + 2 * tm * E * pi          # pos tile
                     + 2 * tm * E * oi)         # output tile
    vmem_limit = int(min(max(2 * per_step_vmem + (4 << 20), 32 << 20), vmem_cap_bytes))

    cost = pl.CostEstimate(
        flops=2 * B * n_pad * K * E,
        transcendentals=0,
        bytes_accessed=(B * n_pad * K * ci      # patch tiles
                        + weight_bytes          # weight fetched once
                        + n_pad * E * pi        # pos fetched once per token tile
                        + B * n_pad * E * oi),  # output writeback
    )

    out = pl.pallas_call(
        patch_embed_kernel,
        out_shape=jax.ShapeDtypeStruct((B, n_pad, E), out_dtype),
        grid_spec=pltpu.PrefetchScalarGridSpec(
            num_scalar_prefetch=0,
            # Token-tile axis OUTER, batch INNER: pos block index is constant
            # across the inner axis -> DMA skipped, pos fetched once per tile.
            grid=(n_pad // tm, B),
            in_specs=[
                pl.BlockSpec((1, tm, K), lambda j, b: (b, j, 0)),          # patch tile
                pl.BlockSpec((K, E), lambda j, b: (0, 0), **w_spec_kwargs),  # weight (resident)
                pl.BlockSpec((tm, E), lambda j, b: (j, 0)),                # pos+bias tile
            ],
            out_specs=pl.BlockSpec((1, tm, E), lambda j, b: (b, j, 0)),
        ),
        compiler_params=pltpu.CompilerParams(
            dimension_semantics=("parallel", "parallel"),
            vmem_limit_bytes=vmem_limit,
            allow_input_fusion=([True, False, False] if allow_im2col_fusion else None),
        ),
        cost_estimate=cost,
    )(patches, w2d, posb)

    if n_pad != n:
        out = out[:, :n, :]
    return out


def embedding_reference(x, conv_w, conv_b, pos_emb, *, patch_size):
    """Pure-JAX reference mirroring the PyTorch forward exactly (f32 conv)."""
    P = patch_size
    y = jax.lax.conv_general_dilated(
        x, conv_w, window_strides=(P, P), padding="VALID",
        dimension_numbers=("NCHW", "OIHW", "NCHW"))
    y = y + conv_b[None, :, None, None]
    B, E, gh, gw = y.shape
    y = y.reshape(B, E, gh * gw).transpose(0, 2, 1)   # flatten(2).transpose(-1, -2)
    return y + pos_emb                                 # dropout = identity (eval)


if __name__ == "__main__":
    # Small shapes consistent with the module:
    #   config.down_sample_list[-1] = 4 channels, spatial 16x16,
    #   config.patch_size = 2 -> n_patche = (8, 8) -> 64 patches,
    #   config.hidden_size = 128 (multiple of 128 for lane-dense output).
    B, C, H, W = 2, 4, 16, 16
    P = 2
    E = 128
    gh, gw = H // P, W // P
    n = gh * gw

    key = jax.random.PRNGKey(0)
    kx, kw, kb, kp = jax.random.split(key, 4)
    x = jax.random.normal(kx, (B, C, H, W), jnp.float32)
    fan_in = C * P * P
    conv_w = jax.random.normal(kw, (E, C, P, P), jnp.float32) * math.sqrt(2.0 / fan_in)
    conv_b = 0.1 * jax.random.normal(kb, (E,), jnp.float32)
    # The module initializes position embeddings to zeros; use random values here
    # so the positional add is actually exercised by the check.
    pos_emb = 0.02 * jax.random.normal(kp, (1, n, E), jnp.float32)

    out = embedding_forward(x, conv_w, conv_b, pos_emb, patch_size=P)
    out = jax.block_until_ready(out)

    ref = embedding_reference(x, conv_w, conv_b, pos_emb, patch_size=P)
    assert out.shape == (B, n, E)
    # bf16 MXU inputs / bf16 pos with f32 accumulation -> loosened tolerance vs f32 reference.
    max_err = jnp.max(jnp.abs(out - ref))
    assert jnp.allclose(out, ref, atol=5e-2, rtol=5e-2), f"mismatch vs reference, max err {max_err}"

    print("KERNEL_OK")
</pallas_src>

<mosaic_0001>
module attributes {stable_mosaic.version = 11 : i64} {
  func.func @patch_embed_kernel(%arg0: i32, %arg1: i32, %arg2: memref<1x64x16xbf16, #tpu.memory_space<vmem>>, %arg3: memref<16x128xbf16, #tpu.memory_space<vmem>>, %arg4: memref<64x128xbf16, #tpu.memory_space<vmem>>, %arg5: memref<1x64x128xf32, #tpu.memory_space<vmem>>) attributes {dimension_semantics = [#tpu.dimension_semantics<parallel>, #tpu.dimension_semantics<parallel>], iteration_bounds = array<i64: 1, 2>, scalar_prefetch = 0 : i64, scratch_operands = 0 : i64, tpu.core_type = #tpu.core_type<tc>, window_params = [{transform_indices = @transform_0, window_bounds = array<i64: 1, 64, 16>}, {pipeline_mode = #tpu.pipeline_mode<synchronous>, transform_indices = @transform_1, window_bounds = array<i64: 16, 128>}, {transform_indices = @transform_2, window_bounds = array<i64: 64, 128>}, {transform_indices = @transform_3, window_bounds = array<i64: 1, 64, 128>}]} {
    %c0 = arith.constant 0 : index
    %c0_0 = arith.constant 0 : index
    %c0_1 = arith.constant 0 : index
    %0 = vector.load %arg2[%c0, %c0_0, %c0_1] : memref<1x64x16xbf16, #tpu.memory_space<vmem>>, vector<1x64x16xbf16>
    %1 = vector.shape_cast %0 : vector<1x64x16xbf16> to vector<64x16xbf16>
    %c0_2 = arith.constant 0 : index
    %c0_3 = arith.constant 0 : index
    %2 = vector.load %arg3[%c0_2, %c0_3] : memref<16x128xbf16, #tpu.memory_space<vmem>>, vector<16x128xbf16>
    %cst = arith.constant dense<0.000000e+00> : vector<64x128xf32>
    %3 = tpu.matmul %1, %2, %cst {dimension_numbers = #tpu.dot_dimension_numbers<[1], [0], [0], [1], [0, 0, 1, 1], [], []>} : vector<64x16xbf16>, vector<16x128xbf16>, vector<64x128xf32> -> vector<64x128xf32>
    %c0_4 = arith.constant 0 : index
    %c0_5 = arith.constant 0 : index
    %4 = vector.load %arg4[%c0_4, %c0_5] : memref<64x128xbf16, #tpu.memory_space<vmem>>, vector<64x128xbf16>
    %5 = arith.extf %4 : vector<64x128xbf16> to vector<64x128xf32>
    %6 = arith.addf %3, %5 : vector<64x128xf32>
    %7 = vector.shape_cast %6 : vector<64x128xf32> to vector<1x64x128xf32>
    %c0_6 = arith.constant 0 : index
    %c0_7 = arith.constant 0 : index
    %c0_8 = arith.constant 0 : index
    %8 = vector.load %arg5[%c0_6, %c0_7, %c0_8] : memref<1x64x128xf32, #tpu.memory_space<vmem>>, vector<1x64x128xf32>
    tpu.vector_store %arg5[%c0_6, %c0_7, %c0_8], %7 {strides = array<i32>} : memref<1x64x128xf32, #tpu.memory_space<vmem>>, vector<1x64x128xf32>,
    return
  }
  func.func @transform_0(%arg0: i32, %arg1: i32) -> (i32, i32, i32) {
    %c0_i32 = arith.constant 0 : i32
    %c0_i32_0 = arith.constant 0 : i32
    return %arg1, %arg0, %c0_i32 : i32, i32, i32
  }
  func.func @transform_1(%arg0: i32, %arg1: i32) -> (i32, i32) {
    %c0_i32 = arith.constant 0 : i32
    %c0_i32_0 = arith.constant 0 : i32
    %c0_i32_1 = arith.constant 0 : i32
    return %c0_i32, %c0_i32_0 : i32, i32
  }
  func.func @transform_2(%arg0: i32, %arg1: i32) -> (i32, i32) {
    %c0_i32 = arith.constant 0 : i32
    %c0_i32_0 = arith.constant 0 : i32
    return %arg0, %c0_i32 : i32, i32
  }
  func.func @transform_3(%arg0: i32, %arg1: i32) -> (i32, i32, i32) {
    %c0_i32 = arith.constant 0 : i32
    %c0_i32_0 = arith.constant 0 : i32
    return %arg1, %arg0, %c0_i32 : i32, i32, i32
  }
}

</mosaic_0001>

<llo_original>
// kernel: tpu_custom_call.1
$region0: #{tpu_custom_call.1}
  #allocation0 [shape = 'u32[]', space=smem, size = 0x4, offset = 0x4, fixed_abs, tag = 'smem constant byte address 0x4 - core index']
  #allocation1 [shape = 'u32[144,128]{1,0:T(1,128)}', space=vmem, size = 0x12000, scoped, tag = 'internal scratch']
  %s0 = inlined_call_operand.vmem [shape: bf16[2,64,16], index: 0, kind: input, shape index: {}]
  %s1 = inlined_call_operand.vmem [shape: bf16[16,128], index: 1, kind: input, shape index: {}]
  %s2 = inlined_call_operand.vmem [shape: bf16[64,128], index: 2, kind: input, shape index: {}]
  %s3 = inlined_call_operand.hbm [shape: f32[2,64,128], index: 3, kind: output, shape index: {}]
  %s4 = sld [smem:[#allocation0]]
  $region45: #{tpu_custom_call.1} parent=0
    _
  %s6 = ssub.s32 1, %s4
  %s7 = scalar_select 0, %s6, %s4
  $region1: #{tpu_custom_call.1} parent=0
    #allocation2 [shape = 'u8[65536]{0}', space=vmem, size = 0x10000, scoped, tag = 'output window, operand 0']
    #allocation3 [shape = 's32[2]{0}', space=sflag, size = 0x8, scoped, tag = 'scoped memory for tpu_custom_call.1']
    %8 = vsyncpa [#allocation3], 0
    %s9 = scalar_lea.sflag [#allocation3], 1
    %10 = vsyncpa %s9, 0
    loop: start=0, step=1, limit=4
    $region2: #{tpu_custom_call.1} parent=1 // loop_pre_header
      _
    $region3: #{tpu_custom_call.1} parent=1 // loop_header
      %s12 = sphi 0, %s16
      %p13 = scmp.ge.s32.totalorder %s12, 4
      %s19 = sphi 0, %s31
      %s20 = sphi 0, %s27
      %s21 = sphi 0, %s19
      %s22 = sphi 0, %s20
      %s23 = sphi 0, %s21
      %s24 = sphi 0, %s22
      %s36 = sphi 0, %s38
      %s39 = sphi 0, %s36
      %s40 = sphi 0, %s39
      %s56 = sphi 0, %s40
      %s60 = sphi 0, %s60
      %s62 = sphi 0, %s60
      %s63 = sphi 0, %s62
      %s77 = sphi 0, %s63
      %s83 = sphi 0, %s85
      %s86 = sphi 0, %s83
      %s87 = sphi 0, %s86
      %s103 = sphi 0, %s87
      %s111 = sphi 0, %s113
      %s114 = sphi 0, %s111
      %s115 = sphi 0, %s114
      %s131 = sphi 0, %s115
    $region4: #{tpu_custom_call.1} parent=1 // loop_header_branch
      %15 = sbr.rel (%p13) target = $region8
    $region5: #{tpu_custom_call.1} parent=1 // loop_body
      %s17 = ssub.s32 %s12, 1
      %s18 = ssub.s32 %s12, 2
      %s25 = sadd.s32 1, %s20
      %p26 = scmp.ge.s32.totalorder %s25, 2
      %s27 = scalar_select %p26, 0, %s25
      %s28 = sadd.s32 1, %s19
      %s29 = scalar_select %p26, %s28, %s19
      %p30 = scmp.ge.s32.totalorder %s29, 1
      %s31 = scalar_select %p30, 0, %s29
      %s32 = ssub.s32 %s20, %s27
      %s33 = ssub.s32 %s19, %s31
      %s34 = sor.u32 %s32, %s33
      %p35 = scmp.eq.s32.totalorder %s34, 0
      %s37 = sadd.s32 %s36, 1
      %s38 = scalar_select %p35, %s36, %s37
      %p41 = pneg %p35
      %p42 = scmp.eq.s32.totalorder %s12, 1
      %p43 = por %p41, %p42
      %p44 = scmp.ne.s32.totalorder %s36, %s39
      %p45 = scmp.eq.s32.totalorder %s12, 0
      %p46 = por %p44, %p45
      %p47 = scmp.ne.s32.totalorder %s36, %s39
      %p48 = scmp.eq.s32.totalorder %s17, 1
      %p49 = por %p47, %p48
      %p50 = scmp.ne.s32.totalorder %s39, %s40
      %p51 = scmp.eq.s32.totalorder %s17, 0
      %p52 = por %p50, %p51
      %p53 = scmp.ne.s32.totalorder %s39, %s40
      %p54 = scmp.eq.s32.totalorder %s18, 1
      %p55 = por %p53, %p54
      %p57 = scmp.ne.s32.totalorder %s40, %s56
      %p58 = scmp.eq.s32.totalorder %s18, 0
      %p59 = por %p57, %p58
      %s61 = sadd.s32 %s60, 1
      %p64 = scmp.eq.s32.totalorder %s12, 1
      %p65 = scmp.ne.s32.totalorder %s60, %s62
      %p66 = scmp.eq.s32.totalorder %s12, 0
      %p67 = por %p65, %p66
      %p68 = scmp.ne.s32.totalorder %s60, %s62
      %p69 = scmp.eq.s32.totalorder %s17, 1
      %p70 = por %p68, %p69
      %p71 = scmp.ne.s32.totalorder %s62, %s63
      %p72 = scmp.eq.s32.totalorder %s17, 0
      %p73 = por %p71, %p72
      %p74 = scmp.ne.s32.totalorder %s62, %s63
      %p75 = scmp.eq.s32.totalorder %s18, 1
      %p76 = por %p74, %p75
      %p78 = scmp.ne.s32.totalorder %s63, %s77
      %p79 = scmp.eq.s32.totalorder %s18, 0
      %p80 = por %p78, %p79
      %s81 = ssub.s32 %s19, %s31
      %p82 = scmp.eq.s32.totalorder %s81, 0
      %s84 = sadd.s32 %s83, 1
      %s85 = scalar_select %p82, %s83, %s84
      %p88 = pneg %p82
      %p89 = scmp.eq.s32.totalorder %s12, 1
      %p90 = por %p88, %p89
      %p91 = scmp.ne.s32.totalorder %s83, %s86
      %p92 = scmp.eq.s32.totalorder %s12, 0
      %p93 = por %p91, %p92
      %p94 = scmp.ne.s32.totalorder %s83, %s86
      %p95 = scmp.eq.s32.totalorder %s17, 1
      %p96 = por %p94, %p95
      %p97 = scmp.ne.s32.totalorder %s86, %s87
      %p98 = scmp.eq.s32.totalorder %s17, 0
      %p99 = por %p97, %p98
      %p100 = scmp.ne.s32.totalorder %s86, %s87
      %p101 = scmp.eq.s32.totalorder %s18, 1
      %p102 = por %p100, %p101
      %p104 = scmp.ne.s32.totalorder %s87, %s103
      %p105 = scmp.eq.s32.totalorder %s18, 0
      %p106 = por %p104, %p105
      %s107 = ssub.s32 %s20, %s27
      %s108 = ssub.s32 %s19, %s31
      %s109 = sor.u32 %s107, %s108
      %p110 = scmp.eq.s32.totalorder %s109, 0
      %s112 = sadd.s32 %s111, 1
      %s113 = scalar_select %p110, %s111, %s112
      %p116 = pneg %p110
      %p117 = scmp.eq.s32.totalorder %s12, 1
      %p118 = por %p116, %p117
      %p119 = scmp.ne.s32.totalorder %s111, %s114
      %p120 = scmp.eq.s32.totalorder %s12, 0
      %p121 = por %p119, %p120
      %p122 = scmp.ne.s32.totalorder %s111, %s114
      %p123 = scmp.eq.s32.totalorder %s17, 1
      %p124 = por %p122, %p123
      %p125 = scmp.ne.s32.totalorder %s114, %s115
      %p126 = scmp.eq.s32.totalorder %s17, 0
      %p127 = por %p125, %p126
      %p128 = scmp.ne.s32.totalorder %s114, %s115
      %p129 = scmp.eq.s32.totalorder %s18, 1
      %p130 = por %p128, %p129
      %p132 = scmp.ne.s32.totalorder %s115, %s131
      %p133 = scmp.eq.s32.totalorder %s18, 0
      %p134 = por %p132, %p133
      %p135 = scmp.le.s32.totalorder 1, %s12
      %p136 = scmp.lt.s32.totalorder %s12, 3
      %p137 = pnand %p135, %p136
      %p138 = pneg %p137
      // Predicated region
      $region9: #{tpu_custom_call.1} parent=5 // pred_check
        _
      $region10: #{tpu_custom_call.1} parent=5 // pred_check_branch
        %140 = sbr.rel (%p137) target = $region12
      $region11: #{tpu_custom_call.1} parent=5 // pred_region
        %s141 = ssub.s32 %s12, 1
        // Predicated region
        $region13: #{tpu_custom_call.1} parent=11 // pred_check
          %p142 = pneg %p73
        $region14: #{tpu_custom_call.1} parent=11 // pred_check_branch
          %144 = sbr.rel (%p142) target = $region16
        $region15: #{tpu_custom_call.1} parent=11 // pred_region
          _
        $region16: #{tpu_custom_call.1} parent=11 // pred_fallthru
          _
        // Predicated region
        $region17: #{tpu_custom_call.1} parent=11 // pred_check
          %p145 = pneg %p99
        $region18: #{tpu_custom_call.1} parent=11 // pred_check_branch
          %147 = sbr.rel (%p145) target = $region20
        $region19: #{tpu_custom_call.1} parent=11 // pred_region
          %s148 = smul.u32 8, %s21
          %p149 = scmp.lt.s32.totalorder %s148, 7
          %s150 = scalar_select %p149, %s148, 7
          %s151 = smul.addr %s150, 4
          %s152 = scalar_lea.vmem %s2, %s151
          %s153 = smul.u32 8, %s21
        $region20: #{tpu_custom_call.1} parent=11 // pred_fallthru
          _
      $region12: #{tpu_custom_call.1} parent=5 // pred_fallthru
        _
      %p154 = scmp.lt.s32.totalorder %s12, 2
      // Predicated region
      $region21: #{tpu_custom_call.1} parent=5 // pred_check
        %p155 = pneg %p154
      $region22: #{tpu_custom_call.1} parent=5 // pred_check_branch
        %157 = sbr.rel (%p155) target = $region24
      $region23: #{tpu_custom_call.1} parent=5 // pred_region
        // Predicated region
        $region25: #{tpu_custom_call.1} parent=23 // pred_check
          %p158 = pneg %p46
        $region26: #{tpu_custom_call.1} parent=23 // pred_check_branch
          %160 = sbr.rel (%p158) target = $region28
        $region27: #{tpu_custom_call.1} parent=23 // pred_region
          %s161 = smul.u32 8, %s19
          %p162 = scmp.lt.s32.totalorder %s20, 1
          %s163 = scalar_select %p162, %s20, 1
          %p164 = scmp.lt.s32.totalorder %s161, 7
          %s165 = scalar_select %p164, %s161, 7
          %s166 = smul.addr %s163, 8
          %s167 = sadd.s32 %s165, %s166
          %s168 = smul.addr %s167, 4
          %s169 = scalar_lea.vmem %s0, %s168
          %s170 = smul.u32 8, %s19
        $region28: #{tpu_custom_call.1} parent=23 // pred_fallthru
          _
      $region24: #{tpu_custom_call.1} parent=5 // pred_fallthru
        _
      %p171 = scmp.le.s32.totalorder 1, %s12
      %p172 = scmp.lt.s32.totalorder %s12, 3
      %p173 = pnand %p171, %p172
      %p174 = pneg %p173
      // Predicated region
      $region29: #{tpu_custom_call.1} parent=5 // pred_check
        _
      $region30: #{tpu_custom_call.1} parent=5 // pred_check_branch
        %176 = sbr.rel (%p173) target = $region32
      $region31: #{tpu_custom_call.1} parent=5 // pred_region
        %s177 = ssub.s32 %s12, 1
        %s178 = smul.u32 8, %s21
        %p179 = scmp.lt.s32.totalorder %s22, 1
        %s180 = scalar_select %p179, %s22, 1
        %p181 = scmp.lt.s32.totalorder %s178, 7
        %s182 = scalar_select %p181, %s178, 7
        %s183 = smul.addr %s180, 8
        %s184 = sadd.s32 %s182, %s183
        %s185 = smul.addr %s184, 4
        %s186 = scalar_lea.vmem %s0, %s185
        %p187 = pneg %p52
        %p188 = pneg %p49
        %p189 = pneg %p73
        %p190 = pneg %p70
        %s191 = smul.u32 8, %s21
        %p192 = scmp.lt.s32.totalorder %s191, 7
        %s193 = scalar_select %p192, %s191, 7
        %s194 = smul.addr %s193, 4
        %s195 = scalar_lea.vmem %s2, %s194
        %p196 = pneg %p99
        %p197 = pneg %p96
        %p198 = pneg %p127
        %p199 = pneg %p124
        %s200 = sand.u32 %s114, 1
        %s201 = scalar_lea.sflag [#allocation3], %s200
        %s202 = sand.u32 %s114, 1
        %s203 = smul.addr %s202, 64
        %s204 = scalar_lea.vmem [#allocation2], %s203
        %s205 = smul.u32 8, %s21
        %p206 = scmp.lt.s32.totalorder %s22, 1
        %s207 = scalar_select %p206, %s22, 1
        %p208 = scmp.lt.s32.totalorder %s205, 7
        %s209 = scalar_select %p208, %s205, 7
        %s210 = smul.addr %s207, 8
        %s211 = sadd.s32 %s209, %s210
        %s212 = smul.addr %s211, 4
        %s213 = scalar_lea.vmem %s0, %s212
        %s214 = smul.u32 8, %s21
        %s215 = smul.u32 8, %s21
        %p216 = scmp.lt.s32.totalorder %s215, 7
        %s217 = scalar_select %p216, %s215, 7
        %s218 = smul.addr %s217, 4
        %s219 = scalar_lea.vmem %s2, %s218
        %s220 = smul.u32 8, %s21
        %s221 = smul.u32 8, %s21
        %v223 = vld [vmem:[%s213] sm:$0xf]
        %v224 = vld [vmem:[%s213 + $0x4] sm:$0xf]
        %v225 = vld [vmem:[%s213 + $0x8] sm:$0xf]
        %v226 = vld [vmem:[%s213 + $0xc] sm:$0xf]
        %v227 = vld [vmem:[%s213 + $0x10] sm:$0xf]
        %v228 = vld [vmem:[%s213 + $0x14] sm:$0xf]
        %v229 = vld [vmem:[%s213 + $0x18] sm:$0xf]
        %v230 = vld [vmem:[%s213 + $0x1c] sm:$0xf]
        %v231 = vld [vmem:[%s1] sm:$0xf]
        %v232 = vld [vmem:[%s1 + $0x4] sm:$0xf]
        %v233 = vld [vmem:[%s219] sm:$0xf]
        %v234 = vld [vmem:[%s219 + $0x4] sm:$0xf]
        %v235 = vld [vmem:[%s219 + $0x8] sm:$0xf]
        %v236 = vld [vmem:[%s219 + $0xc] sm:$0xf]
        %v237 = vld [vmem:[%s219 + $0x10] sm:$0xf]
        %v238 = vld [vmem:[%s219 + $0x14] sm:$0xf]
        %v239 = vld [vmem:[%s219 + $0x18] sm:$0xf]
        %v240 = vld [vmem:[%s219 + $0x1c] sm:$0xf]
        %v241 = vunpack.c.l.bf16 %v233
        %v242 = vunpack.c.l.bf16 %v234
        %v243 = vunpack.c.l.bf16 %v235
        %v244 = vunpack.c.l.bf16 %v236
        %v245 = vunpack.c.l.bf16 %v237
        %v246 = vunpack.c.l.bf16 %v238
        %v247 = vunpack.c.l.bf16 %v239
        %v248 = vunpack.c.l.bf16 %v240
        %v257 = vunpack.c.l.b16 %v223
        %v258 = vunpack.c.l.b16 %v224
        %v259 = vunpack.c.l.b16 %v225
        %v260 = vunpack.c.l.b16 %v226
        %v261 = vunpack.c.l.b16 %v227
        %v262 = vunpack.c.l.b16 %v228
        %v263 = vunpack.c.l.b16 %v229
        %v264 = vunpack.c.l.b16 %v230
        %v265 = vpack.c.b16 %v258, %v257
        %v266 = vpack.c.b16 %v260, %v259
        %v267 = vpack.c.b16 %v262, %v261
        %v268 = vpack.c.b16 %v264, %v263
        %v271 = vunpack.c.l.b16 %v231
        %v272 = vunpack.c.l.b16 %v232
        %v273 = vpack.c.b16 %v272, %v271
        %vm275 = vcmask 130048
        %v277 = vsel %vm275, %v265, 0
        %v280 = vsel %vm275, %v266, 0
        %v283 = vsel %vm275, %v267, 0
        %v286 = vsel %vm275, %v268, 0
        %288 = vmatprep.subr.bf16.mxu0 0
        %289 = vmatpush1.bf16.msra.mxu0 %v273
        %290 = vmatprep.subr.bf16.mxu0 0
        %291 = vmatpush1.bf16.msra.mxu0 0
        %292 = vmatprep.subr.bf16.mxu0 0
        %293 = vmatpush1.bf16.msra.mxu0 0
        %294 = vmatprep.subr.bf16.mxu0 0
        %295 = vmatpush1.bf16.msra.mxu0 0
        %296 = vmatprep.subr.bf16.mxu0 0
        %297 = vmatpush1.bf16.msra.mxu0 0
        %298 = vmatprep.subr.bf16.mxu0 0
        %299 = vmatpush1.bf16.msra.mxu0 0
        %300 = vmatprep.subr.bf16.mxu0 0
        %301 = vmatpush1.bf16.msra.mxu0 0
        %302 = vmatprep.subr.bf16.mxu0 0
        %303 = vmatpush1.bf16.msra.mxu0 0
        %304 = vmatprep.subr.bf16.mxu0 0
        %305 = vmatpush1.bf16.msra.mxu0 0
        %306 = vmatprep.subr.bf16.mxu0 0
        %307 = vmatpush1.bf16.msra.mxu0 0
        %308 = vmatprep.subr.bf16.mxu0 0
        %309 = vmatpush1.bf16.msra.mxu0 0
        %310 = vmatprep.subr.bf16.mxu0 0
        %311 = vmatpush1.bf16.msra.mxu0 0
        %312 = vmatprep.subr.bf16.mxu0 0
        %313 = vmatpush1.bf16.msra.mxu0 0
        %314 = vmatprep.subr.bf16.mxu0 0
        %315 = vmatpush1.bf16.msra.mxu0 0
        %316 = vmatprep.subr.bf16.mxu0 0
        %317 = vmatpush1.bf16.msra.mxu0 0
        %318 = vmatprep.subr.bf16.mxu0 0
        %319 = vmatpush1.bf16.msra.mxu0 0
        %320 = vmatprep.mubr.bf16.mxu0 0
        %321 = vmatmul.mubr.bf16.gmra.mrb[0].mxu0 %v277
        %v322 = vpop.f32.mrb[0].mxu0
        %v323 = vadd.f32 %v241, %v322
        %v324 = vpop.f32.mrb[0].mxu0
        %v325 = vpop.f32.mrb[0].mxu0
        %v326 = vadd.f32 %v242, %v325
        %v327 = vpop.f32.mrb[0].mxu0
        %328 = vmatprep.mubr.bf16.mxu0 0
        %329 = vmatmul.mubr.bf16.gmra.mrb[0].mxu0 %v280
        %v330 = vpop.f32.mrb[0].mxu0
        %v331 = vadd.f32 %v243, %v330
        %v332 = vpop.f32.mrb[0].mxu0
        %v333 = vpop.f32.mrb[0].mxu0
        %v334 = vadd.f32 %v244, %v333
        %v335 = vpop.f32.mrb[0].mxu0
        %336 = vmatprep.mubr.bf16.mxu0 0
        %337 = vmatmul.mubr.bf16.gmra.mrb[0].mxu0 %v283
        %v338 = vpop.f32.mrb[0].mxu0
        %v339 = vadd.f32 %v245, %v338
        %v340 = vpop.f32.mrb[0].mxu0
        %v341 = vpop.f32.mrb[0].mxu0
        %v342 = vadd.f32 %v246, %v341
        %v343 = vpop.f32.mrb[0].mxu0
        %344 = vmatprep.mubr.bf16.mxu0 0
        %345 = vmatmul.mubr.bf16.gmra.mrb[0].mxu0 %v286
        %v346 = vpop.f32.mrb[0].mxu0
        %v347 = vadd.f32 %v247, %v346
        %v348 = vpop.f32.mrb[0].mxu0
        %v349 = vpop.f32.mrb[0].mxu0
        %v350 = vadd.f32 %v248, %v349
        %v351 = vpop.f32.mrb[0].mxu0
        %352 = vdwg.mxu0
        %353 = vst [vmem:[%s204] sm:$0xff] %v323
        %354 = vst [vmem:[%s204 + $0x8] sm:$0xff] %v326
        %355 = vst [vmem:[%s204 + $0x10] sm:$0xff] %v331
        %356 = vst [vmem:[%s204 + $0x18] sm:$0xff] %v334
        %357 = vst [vmem:[%s204 + $0x20] sm:$0xff] %v339
        %358 = vst [vmem:[%s204 + $0x28] sm:$0xff] %v342
        %359 = vst [vmem:[%s204 + $0x30] sm:$0xff] %v347
        %360 = vst [vmem:[%s204 + $0x38] sm:$0xff] %v350
        %s361 = sand.u32 %s114, 1
        %s362 = scalar_lea.sflag [#allocation3], %s361
        %s363 = sand.u32 %s114, 1
        %s364 = smul.addr %s363, 64
        %s365 = scalar_lea.vmem [#allocation2], %s364
        // Predicated region
        $region33: #{tpu_custom_call.1} parent=31 // pred_check
          %p366 = pneg %p124
        $region34: #{tpu_custom_call.1} parent=31 // pred_check_branch
          %368 = sbr.rel (%p366) target = $region36
        $region35: #{tpu_custom_call.1} parent=31 // pred_region
          %s369 = smul.u32 8, %s21
          %s371 = ssub.s32 1024, 1024
          %372 = vsyncadd %s362, %s371
          %s373 = smul.addr %s22, 8
          %s374 = sadd.s32 %s369, %s373
          %s375 = smul.addr %s374, 128
          %s376 = scalar_lea.hbm %s3, %s375
          %s377 = sshll.u32 %s365, 4
          %s378 = int_to_ptr.vmem [resolvable:$true] %s377
          %383 = dma.vmem_to_hbm [thread:$0]  %s378, 1024, %s376, %s362, 128, 128, 8
        $region36: #{tpu_custom_call.1} parent=31 // pred_fallthru
          _
      $region32: #{tpu_custom_call.1} parent=5 // pred_fallthru
        _
      %p384 = scmp.le.s32.totalorder 2, %s12
      // Predicated region
      $region37: #{tpu_custom_call.1} parent=5 // pred_check
        %p385 = pneg %p384
      $region38: #{tpu_custom_call.1} parent=5 // pred_check_branch
        %387 = sbr.rel (%p385) target = $region40
      $region39: #{tpu_custom_call.1} parent=5 // pred_region
        %s388 = ssub.s32 %s12, 2
        // Predicated region
        $region41: #{tpu_custom_call.1} parent=39 // pred_check
          %p389 = pneg %p130
        $region42: #{tpu_custom_call.1} parent=39 // pred_check_branch
          %391 = sbr.rel (%p389) target = $region44
        $region43: #{tpu_custom_call.1} parent=39 // pred_region
          %s392 = sand.u32 %s115, 1
          %s393 = scalar_lea.sflag [#allocation3], %s392
          %s394 = sand.u32 %s115, 1
          %s395 = smul.addr %s394, 64
          %s396 = scalar_lea.vmem [#allocation2], %s395
          %397 = dma.done %s393, 1024
        $region44: #{tpu_custom_call.1} parent=39 // pred_fallthru
          _
      $region40: #{tpu_custom_call.1} parent=5 // pred_fallthru
        _
    $region6: #{tpu_custom_call.1} parent=1 // loop_footer
      %s16 = sadd.s32 1, %s12
    $region7: #{tpu_custom_call.1} parent=1 // loop_footer_branch
      %11 = sbr.rel target = $region3
    $region8: #{tpu_custom_call.1} parent=1 // loop_exit
      _
    %398 = vsyncpa [#allocation3], 1
    %s399 = scalar_lea.sflag [#allocation3], 1
    %400 = vsyncpa %s399, 1

</llo_original>
